<compile_context>
chip_gen: v5e
topology: v5e:2x2
jax: 0.10.0
libtpu: 0.0.40
codegen_flags: <defaults>
</compile_context>

<pallas_src>
import math

import jax
import jax.numpy as jnp
from jax.experimental import pallas as pl
from jax.experimental.pallas import tpu as pltpu


def _round_up(x, m):
    return ((x + m - 1) // m) * m


def _mlp0_kernel(zi_ref, hi_ref, wt1_ref, wt2_ref, b_ref, o_ref):
    # Fused "concat + linear": two accumulated MXU matmuls, f32 accumulation.
    y = jnp.dot(zi_ref[...], wt1_ref[...], preferred_element_type=jnp.float32)
    y = y + jnp.dot(hi_ref[...], wt2_ref[...], preferred_element_type=jnp.float32)
    y = y + b_ref[...]  # f32 bias; padded lanes carry -1e30 (softmax mask)

    # LeakyReLU (negative_slope = 0.01)
    y = jnp.where(y >= 0, y, 0.01 * y)

    # Numerically stable softmax over the feature axis.  Padded lanes are
    # ~-1e28 here, so exp() underflows to 0 and they do not affect the sum.
    y = y - jnp.max(y, axis=-1, keepdims=True)
    e = jnp.exp(y)
    denom = jnp.sum(e, axis=-1, keepdims=True)
    inv = pl.reciprocal(denom, approx=True)     # EUP slot (cheap)
    inv = inv * (2.0 - denom * inv)             # one Newton step -> ~f32 accuracy
    o_ref[...] = (e * inv).astype(o_ref.dtype)


def prepare_params(W, b, d1, lane=128):
    """One-time (load-time) param prep: split, transpose and lane-pad the weight.

    W: [Out, D1+D2] (PyTorch nn.Linear layout), b: [Out].
    Returns Wt1 [D1, Out_pad], Wt2 [D2, Out_pad], b_pad [1, Out_pad] (f32), Out.
    """
    Out = W.shape[0]
    out_pad = _round_up(Out, lane)
    Wt1 = jnp.transpose(W[:, :d1])   # [D1, Out]
    Wt2 = jnp.transpose(W[:, d1:])   # [D2, Out]
    pad = out_pad - Out
    b_f32 = b.astype(jnp.float32)
    if pad:
        Wt1 = jnp.pad(Wt1, ((0, 0), (0, pad)))
        Wt2 = jnp.pad(Wt2, ((0, 0), (0, pad)))
        # -1e30 bias on padded columns == -inf softmax mask after LeakyReLU.
        b_f32 = jnp.pad(b_f32, (0, pad), constant_values=-1e30)
    return Wt1, Wt2, b_f32.reshape(1, -1), Out


def mlp0_forward(Zi, Hi, Wt1, Wt2, b_pad, out_dim, *, block_m=256, use_bf16=False):
    """Zi: [B, D1], Hi: [B, D2]; Wt*/b_pad from prepare_params."""
    out_dtype = Zi.dtype
    if use_bf16:
        Zi = Zi.astype(jnp.bfloat16)
        Hi = Hi.astype(jnp.bfloat16)
        Wt1 = Wt1.astype(jnp.bfloat16)
        Wt2 = Wt2.astype(jnp.bfloat16)

    B, D1 = Zi.shape
    D2 = Hi.shape[1]
    out_pad = Wt1.shape[1]

    # Batch tile: multiple of 8 sublanes, capped at block_m.
    tm = min(block_m, _round_up(B, 8))
    b_padded = _round_up(B, tm)
    if b_padded != B:
        Zi = jnp.pad(Zi, ((0, b_padded - B), (0, 0)))
        Hi = jnp.pad(Hi, ((0, b_padded - B), (0, 0)))

    grid = (b_padded // tm,)

    out = pl.pallas_call(
        _mlp0_kernel,
        out_shape=jax.ShapeDtypeStruct((b_padded, out_pad), out_dtype),
        grid=grid,
        in_specs=[
            pl.BlockSpec((tm, D1), lambda i: (i, 0)),        # Zi tile (pipelined)
            pl.BlockSpec((tm, D2), lambda i: (i, 0)),        # Hi tile (pipelined)
            pl.BlockSpec((D1, out_pad), lambda i: (0, 0)),   # Wt1 (VMEM resident)
            pl.BlockSpec((D2, out_pad), lambda i: (0, 0)),   # Wt2 (VMEM resident)
            pl.BlockSpec((1, out_pad), lambda i: (0, 0)),    # bias (VMEM resident)
        ],
        out_specs=pl.BlockSpec((tm, out_pad), lambda i: (i, 0)),
        compiler_params=pltpu.CompilerParams(
            dimension_semantics=("parallel",),               # batch tiles independent
            vmem_limit_bytes=32 * 1024 * 1024,               # safe on v5e/v6e/v7x
        ),
    )(Zi, Hi, Wt1, Wt2, b_pad)

    # Drop batch padding and lane padding.
    return out[:B, :out_dim]


def _reference(Zi, Hi, W, b):
    x = jnp.concatenate([Zi, Hi], axis=1)
    y = x @ W.T + b
    y = jnp.where(y >= 0, y, 0.01 * y)
    return jax.nn.softmax(y, axis=1)


if __name__ == "__main__":
    key = jax.random.PRNGKey(0)
    k1, k2, k3, k4 = jax.random.split(key, 4)

    # Small shapes consistent with the module: Zi [B, D1], Hi [B, D2].
    B, D1, D2, Out = 8, 16, 16, 32
    In = D1 + D2

    Zi = jax.random.normal(k1, (B, D1), dtype=jnp.float32)
    Hi = jax.random.normal(k2, (B, D2), dtype=jnp.float32)

    # Deterministic nn.Linear-style init: U(-1/sqrt(In), 1/sqrt(In)).
    bound = 1.0 / math.sqrt(In)
    W = jax.random.uniform(k3, (Out, In), jnp.float32, -bound, bound)
    b = jax.random.uniform(k4, (Out,), jnp.float32, -bound, bound)

    # One-time parameter prep (split + transpose + lane padding).
    Wt1, Wt2, b_pad, out_dim = prepare_params(W, b, D1)

    # f32 path, small batch (single grid step).
    out = mlp0_forward(Zi, Hi, Wt1, Wt2, b_pad, out_dim)
    out = jax.block_until_ready(out)
    ref = _reference(Zi, Hi, W, b)
    assert out.shape == (B, Out)
    assert jnp.allclose(out, ref, atol=1e-5, rtol=1e-5), "f32 mismatch vs reference"
    assert jnp.allclose(jnp.sum(out, axis=1), 1.0, atol=1e-5), "rows must sum to 1"

    # Larger (still modest) batch: exercises batch tiling, batch padding and the
    # bf16-matmul / f32-accumulate fast path.
    B2 = 300
    Zi2 = jax.random.normal(k1, (B2, D1), dtype=jnp.float32)
    Hi2 = jax.random.normal(k2, (B2, D2), dtype=jnp.float32)
    out2 = mlp0_forward(Zi2, Hi2, Wt1, Wt2, b_pad, out_dim,
                        block_m=128, use_bf16=True)
    out2 = jax.block_until_ready(out2)
    ref2 = _reference(Zi2, Hi2, W, b)
    assert out2.shape == (B2, Out)
    assert jnp.allclose(out2, ref2, atol=2e-2, rtol=2e-2), "bf16 mismatch vs reference"
    assert jnp.allclose(jnp.sum(out2, axis=1), 1.0, atol=1e-3), "rows must sum to 1"

    print("KERNEL_OK")
</pallas_src>

<mosaic_0001>
module attributes {stable_mosaic.version = 11 : i64} {
  func.func @_mlp0_kernel(%arg0: i32, %arg1: memref<8x16xf32, #tpu.memory_space<vmem>>, %arg2: memref<8x16xf32, #tpu.memory_space<vmem>>, %arg3: memref<16x128xf32, #tpu.memory_space<vmem>>, %arg4: memref<16x128xf32, #tpu.memory_space<vmem>>, %arg5: memref<1x128xf32, #tpu.memory_space<vmem>>, %arg6: memref<8x128xf32, #tpu.memory_space<vmem>>) attributes {dimension_semantics = [#tpu.dimension_semantics<parallel>], iteration_bounds = array<i64: 1>, scalar_prefetch = 0 : i64, scratch_operands = 0 : i64, tpu.core_type = #tpu.core_type<tc>, window_params = [{transform_indices = @transform_0, window_bounds = array<i64: 8, 16>}, {transform_indices = @transform_1, window_bounds = array<i64: 8, 16>}, {pipeline_mode = #tpu.pipeline_mode<synchronous>, transform_indices = @transform_2, window_bounds = array<i64: 16, 128>}, {pipeline_mode = #tpu.pipeline_mode<synchronous>, transform_indices = @transform_3, window_bounds = array<i64: 16, 128>}, {pipeline_mode = #tpu.pipeline_mode<synchronous>, transform_indices = @transform_4, window_bounds = array<i64: 1, 128>}, {transform_indices = @transform_5, window_bounds = array<i64: 8, 128>}]} {
    %c0 = arith.constant 0 : index
    %c0_0 = arith.constant 0 : index
    %0 = vector.load %arg1[%c0, %c0_0] : memref<8x16xf32, #tpu.memory_space<vmem>>, vector<8x16xf32>
    %c0_1 = arith.constant 0 : index
    %c0_2 = arith.constant 0 : index
    %1 = vector.load %arg3[%c0_1, %c0_2] : memref<16x128xf32, #tpu.memory_space<vmem>>, vector<16x128xf32>
    %cst = arith.constant dense<0.000000e+00> : vector<8x128xf32>
    %2 = tpu.matmul %0, %1, %cst {dimension_numbers = #tpu.dot_dimension_numbers<[1], [0], [0], [1], [0, 0, 1, 1], [], []>} : vector<8x16xf32>, vector<16x128xf32>, vector<8x128xf32> -> vector<8x128xf32>
    %c0_3 = arith.constant 0 : index
    %c0_4 = arith.constant 0 : index
    %3 = vector.load %arg2[%c0_3, %c0_4] : memref<8x16xf32, #tpu.memory_space<vmem>>, vector<8x16xf32>
    %c0_5 = arith.constant 0 : index
    %c0_6 = arith.constant 0 : index
    %4 = vector.load %arg4[%c0_5, %c0_6] : memref<16x128xf32, #tpu.memory_space<vmem>>, vector<16x128xf32>
    %cst_7 = arith.constant dense<0.000000e+00> : vector<8x128xf32>
    %5 = tpu.matmul %3, %4, %cst_7 {dimension_numbers = #tpu.dot_dimension_numbers<[1], [0], [0], [1], [0, 0, 1, 1], [], []>} : vector<8x16xf32>, vector<16x128xf32>, vector<8x128xf32> -> vector<8x128xf32>
    %6 = arith.addf %2, %5 : vector<8x128xf32>
    %c0_8 = arith.constant 0 : index
    %c0_9 = arith.constant 0 : index
    %7 = vector.load %arg5[%c0_8, %c0_9] : memref<1x128xf32, #tpu.memory_space<vmem>>, vector<1x128xf32>
    %8 = vector.broadcast %7 : vector<1x128xf32> to vector<8x128xf32>
    %9 = arith.addf %6, %8 : vector<8x128xf32>
    %cst_10 = arith.constant 0.000000e+00 : f32
    %10 = vector.broadcast %cst_10 : f32 to vector<8x128xf32>
    %11 = arith.cmpf oge, %9, %10 : vector<8x128xf32>
    %cst_11 = arith.constant 0.00999999977 : f32
    %12 = vector.broadcast %cst_11 : f32 to vector<8x128xf32>
    %13 = arith.mulf %12, %9 : vector<8x128xf32>
    %14 = arith.select %11, %9, %13 : vector<8x128xi1>, vector<8x128xf32>
    %cst_12 = arith.constant dense<0xFF800000> : vector<8xf32>
    %15 = vector.multi_reduction <maximumf>, %14, %cst_12 [1] : vector<8x128xf32> to vector<8xf32>
    %16 = vector.shape_cast %15 : vector<8xf32> to vector<8x1xf32>
    %17 = vector.broadcast %16 : vector<8x1xf32> to vector<8x128xf32>
    %18 = arith.subf %14, %17 : vector<8x128xf32>
    %19 = math.exp %18 : vector<8x128xf32>
    %cst_13 = arith.constant dense<0.000000e+00> : vector<8xf32>
    %20 = vector.multi_reduction <add>, %19, %cst_13 [1] : vector<8x128xf32> to vector<8xf32>
    %21 = vector.shape_cast %20 : vector<8xf32> to vector<8x1xf32>
    %22 = tpu.reciprocal %21 {approx = true} : vector<8x1xf32> -> vector<8x1xf32>
    %23 = arith.mulf %21, %22 : vector<8x1xf32>
    %cst_14 = arith.constant 2.000000e+00 : f32
    %24 = vector.broadcast %cst_14 : f32 to vector<8x1xf32>
    %25 = arith.subf %24, %23 : vector<8x1xf32>
    %26 = arith.mulf %22, %25 : vector<8x1xf32>
    %27 = vector.broadcast %26 : vector<8x1xf32> to vector<8x128xf32>
    %28 = arith.mulf %19, %27 : vector<8x128xf32>
    %c0_15 = arith.constant 0 : index
    %c0_16 = arith.constant 0 : index
    %29 = vector.load %arg6[%c0_15, %c0_16] : memref<8x128xf32, #tpu.memory_space<vmem>>, vector<8x128xf32>
    tpu.vector_store %arg6[%c0_15, %c0_16], %28 {strides = array<i32>} : memref<8x128xf32, #tpu.memory_space<vmem>>, vector<8x128xf32>,
    return
  }
  func.func @transform_0(%arg0: i32) -> (i32, i32) {
    %c0_i32 = arith.constant 0 : i32
    %c0_i32_0 = arith.constant 0 : i32
    return %arg0, %c0_i32 : i32, i32
  }
  func.func @transform_1(%arg0: i32) -> (i32, i32) {
    %c0_i32 = arith.constant 0 : i32
    %c0_i32_0 = arith.constant 0 : i32
    return %arg0, %c0_i32 : i32, i32
  }
  func.func @transform_2(%arg0: i32) -> (i32, i32) {
    %c0_i32 = arith.constant 0 : i32
    %c0_i32_0 = arith.constant 0 : i32
    %c0_i32_1 = arith.constant 0 : i32
    return %c0_i32, %c0_i32_0 : i32, i32
  }
  func.func @transform_3(%arg0: i32) -> (i32, i32) {
    %c0_i32 = arith.constant 0 : i32
    %c0_i32_0 = arith.constant 0 : i32
    %c0_i32_1 = arith.constant 0 : i32
    return %c0_i32, %c0_i32_0 : i32, i32
  }
  func.func @transform_4(%arg0: i32) -> (i32, i32) {
    %c0_i32 = arith.constant 0 : i32
    %c0_i32_0 = arith.constant 0 : i32
    %c0_i32_1 = arith.constant 0 : i32
    return %c0_i32, %c0_i32_0 : i32, i32
  }
  func.func @transform_5(%arg0: i32) -> (i32, i32) {
    %c0_i32 = arith.constant 0 : i32
    %c0_i32_0 = arith.constant 0 : i32
    return %arg0, %c0_i32 : i32, i32
  }
}

</mosaic_0001>

<llo_original>
// kernel: tpu_custom_call.1
$region0: #{tpu_custom_call.1}
  #allocation0 [shape = 'u32[]', space=smem, size = 0x4, offset = 0x4, fixed_abs, tag = 'smem constant byte address 0x4 - core index']
  #allocation1 [shape = 'u32[72,128]{1,0:T(1,128)}', space=vmem, size = 0x9000, scoped, tag = 'internal scratch']
  %s0 = inlined_call_operand.hbm [shape: f32[8,16], index: 0, kind: input, shape index: {}]
  %s1 = inlined_call_operand.hbm [shape: f32[8,16], index: 1, kind: input, shape index: {}]
  %s2 = inlined_call_operand.hbm [shape: f32[16,128], index: 2, kind: input, shape index: {}]
  %s3 = inlined_call_operand.hbm [shape: f32[16,128], index: 3, kind: input, shape index: {}]
  %s4 = inlined_call_operand.vmem [shape: f32[1,128], index: 4, kind: input, shape index: {}]
  %s5 = inlined_call_operand.hbm [shape: f32[8,128], index: 5, kind: output, shape index: {}]
  %s6 = sld [smem:[#allocation0]]
  $region46: #{tpu_custom_call.1} parent=0
    _
  %s8 = ssub.s32 1, %s6
  %s9 = scalar_select 0, %s8, %s6
  $region1: #{tpu_custom_call.1} parent=0
    #allocation2 [shape = 'u8[4096]{0}', space=vmem, size = 0x1000, scoped, tag = 'input window, operand 0, single buffered']
    #allocation3 [shape = 's32[1]{0}', space=sflag, size = 0x4, scoped, tag = 'scoped memory for tpu_custom_call.1']
    #allocation4 [shape = 's32[1]{0}', space=sflag, size = 0x4, scoped, tag = 'scoped memory for tpu_custom_call.1']
    #allocation5 [shape = 'u8[4096]{0}', space=vmem, size = 0x1000, scoped, tag = 'input window, operand 1, single buffered']
    #allocation6 [shape = 's32[1]{0}', space=sflag, size = 0x4, scoped, tag = 'scoped memory for tpu_custom_call.1']
    #allocation7 [shape = 'u8[8192]{0}', space=vmem, size = 0x2000, scoped, tag = 'input window, operand 2, single buffered']
    #allocation8 [shape = 'u8[8192]{0}', space=vmem, size = 0x2000, scoped, tag = 'input window, operand 3, single buffered']
    #allocation9 [shape = 's32[1]{0}', space=sflag, size = 0x4, scoped, tag = 'scoped memory for tpu_custom_call.1']
    #allocation10 [shape = 'u8[4096]{0}', space=vmem, size = 0x1000, scoped, tag = 'output window, operand 0, single buffered']
    %10 = vsyncpa [#allocation3], 0
    %11 = vsyncpa [#allocation6], 0
    %12 = vsyncpa [#allocation9], 0
    %13 = vsyncpa [#allocation4], 0
    // Predicated region
    $region2: #{tpu_custom_call.1} parent=1 // pred_check
      _
    $region3: #{tpu_custom_call.1} parent=1 // pred_check_branch
      %15 = sbr.rel (0) target = $region5
    $region4: #{tpu_custom_call.1} parent=1 // pred_region
      %17 = vsyncadd [#allocation3], 0
      %s19 = sshll.u32 %s0, 4
      %s20 = int_to_ptr.hbm [resolvable:$true] %s19
      %s21 = sshll.u32 [#allocation2], 4
      %s22 = int_to_ptr.vmem [resolvable:$true] %s21
      %24 = dma.hbm_to_vmem [thread:$0]  %s20, 128, %s22, [#allocation3]
    $region5: #{tpu_custom_call.1} parent=1 // pred_fallthru
      _
    // Predicated region
    $region6: #{tpu_custom_call.1} parent=1 // pred_check
      _
    $region7: #{tpu_custom_call.1} parent=1 // pred_check_branch
      %26 = sbr.rel (0) target = $region9
    $region8: #{tpu_custom_call.1} parent=1 // pred_region
      %28 = vsyncadd [#allocation6], 0
      %s30 = sshll.u32 %s1, 4
      %s31 = int_to_ptr.hbm [resolvable:$true] %s30
      %s32 = sshll.u32 [#allocation5], 4
      %s33 = int_to_ptr.vmem [resolvable:$true] %s32
      %35 = dma.hbm_to_vmem [thread:$0]  %s31, 128, %s33, [#allocation6]
    $region9: #{tpu_custom_call.1} parent=1 // pred_fallthru
      _
    // Predicated region
    $region10: #{tpu_custom_call.1} parent=1 // pred_check
      _
    $region11: #{tpu_custom_call.1} parent=1 // pred_check_branch
      %37 = sbr.rel (0) target = $region13
    $region12: #{tpu_custom_call.1} parent=1 // pred_region
      %39 = vsyncadd [#allocation6], 0
      %s40 = sshll.u32 %s2, 4
      %s41 = int_to_ptr.hbm [resolvable:$true] %s40
      %s42 = sshll.u32 [#allocation7], 4
      %s43 = int_to_ptr.vmem [resolvable:$true] %s42
      %48 = dma.hbm_to_vmem [thread:$0]  %s41, 256, %s43, [#allocation6], 128, 128, 8
    $region13: #{tpu_custom_call.1} parent=1 // pred_fallthru
      _
    // Predicated region
    $region14: #{tpu_custom_call.1} parent=1 // pred_check
      _
    $region15: #{tpu_custom_call.1} parent=1 // pred_check_branch
      %50 = sbr.rel (0) target = $region17
    $region16: #{tpu_custom_call.1} parent=1 // pred_region
      %52 = vsyncadd [#allocation9], 0
      %s53 = sshll.u32 %s3, 4
      %s54 = int_to_ptr.hbm [resolvable:$true] %s53
      %s55 = sshll.u32 [#allocation8], 4
      %s56 = int_to_ptr.vmem [resolvable:$true] %s55
      %61 = dma.hbm_to_vmem [thread:$0]  %s54, 256, %s56, [#allocation9], 128, 128, 8
    $region17: #{tpu_custom_call.1} parent=1 // pred_fallthru
      _
    // Predicated region
    $region18: #{tpu_custom_call.1} parent=1 // pred_check
      _
    $region19: #{tpu_custom_call.1} parent=1 // pred_check_branch
      %63 = sbr.rel (0) target = $region21
    $region20: #{tpu_custom_call.1} parent=1 // pred_region
      _
    $region21: #{tpu_custom_call.1} parent=1 // pred_fallthru
      _
    // Predicated region
    $region22: #{tpu_custom_call.1} parent=1 // pred_check
      _
    $region23: #{tpu_custom_call.1} parent=1 // pred_check_branch
      %65 = sbr.rel (0) target = $region25
    $region24: #{tpu_custom_call.1} parent=1 // pred_region
      %67 = dma.done [#allocation3], 128
    $region25: #{tpu_custom_call.1} parent=1 // pred_fallthru
      _
    // Predicated region
    $region26: #{tpu_custom_call.1} parent=1 // pred_check
      _
    $region27: #{tpu_custom_call.1} parent=1 // pred_check_branch
      %69 = sbr.rel (0) target = $region29
    $region28: #{tpu_custom_call.1} parent=1 // pred_region
      %71 = dma.done [#allocation6], 128
    $region29: #{tpu_custom_call.1} parent=1 // pred_fallthru
      _
    // Predicated region
    $region30: #{tpu_custom_call.1} parent=1 // pred_check
      _
    $region31: #{tpu_custom_call.1} parent=1 // pred_check_branch
      %73 = sbr.rel (0) target = $region33
    $region32: #{tpu_custom_call.1} parent=1 // pred_region
      %75 = dma.done [#allocation6], 256
    $region33: #{tpu_custom_call.1} parent=1 // pred_fallthru
      _
    // Predicated region
    $region34: #{tpu_custom_call.1} parent=1 // pred_check
      _
    $region35: #{tpu_custom_call.1} parent=1 // pred_check_branch
      %77 = sbr.rel (0) target = $region37
    $region36: #{tpu_custom_call.1} parent=1 // pred_region
      %79 = dma.done [#allocation9], 256
    $region37: #{tpu_custom_call.1} parent=1 // pred_fallthru
      _
    %v80 = vld [vmem:[#allocation2] sm:$0xff]
    %v81 = vld [vmem:[#allocation7] sm:$0xff]
    %v82 = vld [vmem:[#allocation7 + $0x8] sm:$0xff]
    %v83 = vld [vmem:[#allocation5] sm:$0xff]
    %v84 = vld [vmem:[#allocation8] sm:$0xff]
    %v85 = vld [vmem:[#allocation8 + $0x8] sm:$0xff]
    %vm86 = vcmask 130048
    %v88 = vsel %vm86, %v83, 0
    %90 = vmatpush.msra.mxu0 0.0
    %91 = vmatpush.msra.mxu0 0.0
    %92 = vmatpush.msra.mxu0 0.0
    %93 = vmatpush.msra.mxu0 0.0
    %94 = vmatpush.msra.mxu0 0.0
    %95 = vmatpush.msra.mxu0 0.0
    %96 = vmatpush.msra.mxu0 0.0
    %97 = vmatpush.msra.mxu0 0.0
    %98 = vmatpush.msra.mxu0 0.0
    %99 = vmatpush.msra.mxu0 0.0
    %100 = vmatpush.msra.mxu0 0.0
    %101 = vmatpush.msra.mxu0 0.0
    %102 = vmatpush.msra.mxu0 0.0
    %103 = vmatpush.msra.mxu0 0.0
    %104 = vmatpush.msra.mxu0 %v85
    %105 = vmatpush.msra.mxu0 %v84
    %106 = vmatmul.f32.gmra.mxu0 %v88
    %v107 = vpop.f32.mrf.mxu0
    %v108 = vadd.f32 0.0, %v107
    %109 = vdwg.mxu0
    %v111 = vsel %vm86, %v80, 0
    %113 = vmatpush.msra.mxu0 0.0
    %114 = vmatpush.msra.mxu0 0.0
    %115 = vmatpush.msra.mxu0 0.0
    %116 = vmatpush.msra.mxu0 0.0
    %117 = vmatpush.msra.mxu0 0.0
    %118 = vmatpush.msra.mxu0 0.0
    %119 = vmatpush.msra.mxu0 0.0
    %120 = vmatpush.msra.mxu0 0.0
    %121 = vmatpush.msra.mxu0 0.0
    %122 = vmatpush.msra.mxu0 0.0
    %123 = vmatpush.msra.mxu0 0.0
    %124 = vmatpush.msra.mxu0 0.0
    %125 = vmatpush.msra.mxu0 0.0
    %126 = vmatpush.msra.mxu0 0.0
    %127 = vmatpush.msra.mxu0 %v82
    %128 = vmatpush.msra.mxu0 %v81
    %129 = vmatmul.f32.gmra.mxu0 %v111
    %v130 = vpop.f32.mrf.mxu0
    %v131 = vadd.f32 %v108, %v130
    %132 = vdwg.mxu0
    %v133 = vld [vmem:[%s4] sm:$0x1]
    %v135 = vperm.slane %v133, 0
    %v137 = vadd.f32 %v131, %v135
    %vm138 = vcmp.ge.f32.partialorder %v137, 0.0
    %v139 = vmul.f32 %v137, 0.01
    %v140 = vsel %vm138, %v137, %v139
    %141 = vmax.xlane.f32.xlu0 %v140
    %v142 = vpop.xlane.xlu0 %141
    %v143 = vsub.f32 %v140, %v142
    %v144 = vmul.f32 %v143, 1.442695
    %v145 = vpow.pop %v144
    %146 = vadd.xlane.f32.xlu0 %v145
    %v147 = vpop.xlane.xlu0 %146
    %v148 = vrcp.pop %v147
    %v149 = vmul.f32 %v147, %v148
    %v150 = vsub.f32 2.0, %v149
    %v151 = vmul.f32 %v148, %v150
    %v152 = vmul.f32 %v145, %v151
    %153 = vst [vmem:[#allocation10] sm:$0xff] %v152
    // Predicated region
    $region38: #{tpu_custom_call.1} parent=1 // pred_check
      _
    $region39: #{tpu_custom_call.1} parent=1 // pred_check_branch
      %155 = sbr.rel (0) target = $region41
    $region40: #{tpu_custom_call.1} parent=1 // pred_region
      %157 = vsyncadd [#allocation4], 0
      %s159 = sshll.u32 [#allocation10], 4
      %s160 = int_to_ptr.vmem [resolvable:$true] %s159
      %s161 = sshll.u32 %s5, 4
      %s162 = int_to_ptr.hbm [resolvable:$true] %s161
      %164 = dma.vmem_to_hbm [thread:$0]  %s160, 128, %s162, [#allocation4]
    $region41: #{tpu_custom_call.1} parent=1 // pred_fallthru
      _
    // Predicated region
    $region42: #{tpu_custom_call.1} parent=1 // pred_check
      _
    $region43: #{tpu_custom_call.1} parent=1 // pred_check_branch
      %166 = sbr.rel (0) target = $region45
    $region44: #{tpu_custom_call.1} parent=1 // pred_region
      %168 = dma.done [#allocation4], 128
    $region45: #{tpu_custom_call.1} parent=1 // pred_fallthru
      _
    %169 = vsyncpa [#allocation3], 1
    %170 = vsyncpa [#allocation6], 1
    %171 = vsyncpa [#allocation9], 1
    %172 = vsyncpa [#allocation4], 1

</llo_original>
